<compile_context>
chip_gen: v6e
topology: v6e:2x2x1
jax: 0.10.0
libtpu: 0.0.40
codegen_flags: <defaults>
</compile_context>

<pallas_src>
import functools

import jax
import jax.numpy as jnp
import numpy as np
from jax.experimental import pallas as pl
from jax.experimental.pallas import tpu as pltpu

BN_EPS = 1e-5


def _round_up(x, m):
    return ((x + m - 1) // m) * m


# --------------------------------------------------------------------------- #
# Kernel
# --------------------------------------------------------------------------- #
def vftc_kernel(xv_ref, xf1_ref, xf2_ref, w1_ref, w2_ref, vec_ref, out_ref):
    dv = xv_ref.shape[1]
    df = xf1_ref.shape[1]
    L1 = w1_ref.shape[1]          # fc1 output width (permuted)
    W2 = w2_ref.shape[1]          # fc2 output width (permuted + zero padded)
    half1 = L1 // 2
    half2 = W2 // 2

    # Packed small vectors: row0 = b1 (permuted), row1 = b2 (BN-folded,
    # permuted, padded), row2 = w3 (zero padded), row3[0] = b3.
    vec = vec_ref[...]
    b1 = vec[0:1, :L1]
    b2 = vec[1:2, :W2]
    w3row = vec[2:3, :half2]
    b3 = vec[3:4, 0:1]

    # fc1 + ReLU, with the input concat fused as three row-block matmuls.
    h1 = (jnp.dot(xv_ref[...], w1_ref[0:dv, :],
                  preferred_element_type=jnp.float32)
          + jnp.dot(xf1_ref[...], w1_ref[dv:dv + df, :],
                    preferred_element_type=jnp.float32)
          + jnp.dot(xf2_ref[...], w1_ref[dv + df:, :],
                    preferred_element_type=jnp.float32)
          + b1)
    h1 = jnp.maximum(h1, 0.0)

    # MaxPool1d(2): fc1 columns were permuted (even, then odd) at param-prep
    # time, so pooling is an elementwise max of the two contiguous halves.
    p1 = jnp.maximum(h1[:, :half1], h1[:, half1:])

    # fc2 + ReLU (eval-mode BatchNorm already folded into w2 / b2).
    h2 = jnp.dot(p1, w2_ref[...], preferred_element_type=jnp.float32) + b2
    h2 = jnp.maximum(h2, 0.0)

    # MaxPool1d(2): fc2 columns were permuted even/odd and zero-padded so each
    # half is 128-lane aligned; padded lanes pool to 0 and carry zero w3 weight.
    p2 = jnp.maximum(h2[:, :half2], h2[:, half2:])

    # fc3 (single output): VPU multiply + XLU lane reduction instead of an
    # N=1 MXU matmul.
    out_ref[...] = jnp.sum(p2 * w3row, axis=-1, keepdims=True) + b3


# --------------------------------------------------------------------------- #
# One-time parameter preparation (host side, OUT of the hot path)
# --------------------------------------------------------------------------- #
def prepare_params(params, bn_eps=BN_EPS):
    w1 = np.asarray(params["w1"], np.float32)        # (dim, L)
    b1 = np.asarray(params["b1"], np.float32)        # (L,)
    w2 = np.asarray(params["w2"], np.float32)        # (L/2, L/4)
    b2 = np.asarray(params["b2"], np.float32)        # (L/4,)
    w3 = np.asarray(params["w3"], np.float32)        # (L/8, 1)
    b3 = np.asarray(params["b3"], np.float32)        # (1,)
    gamma = np.asarray(params["gamma"], np.float32)
    beta = np.asarray(params["beta"], np.float32)
    mean = np.asarray(params["running_mean"], np.float32)
    var = np.asarray(params["running_var"], np.float32)

    L = w1.shape[1]
    half1 = L // 2
    L4 = w2.shape[1]
    n_pool2 = L4 // 2                                 # = L/8, fc3 fan-in

    # fc1: permute output columns even-then-odd so MaxPool1d(2) becomes a max
    # of the two contiguous halves.
    perm1 = np.concatenate([np.arange(0, L, 2), np.arange(1, L, 2)])
    w1p = np.ascontiguousarray(w1[:, perm1])
    b1p = b1[perm1]

    # Fold eval-mode BatchNorm into fc2:  bn(p1) = p1*s + t
    s = gamma / np.sqrt(var + bn_eps)
    t = beta - mean * s
    w2f = s[:, None] * w2
    b2f = b2 + t @ w2

    # fc2: permute output columns even/odd and zero-pad so each pooled half is
    # a multiple of 128 lanes (lane-aligned slices in the kernel).
    pad_half = _round_up(n_pool2, 128)
    w2_width = 2 * pad_half
    w2p = np.zeros((half1, w2_width), np.float32)
    b2p = np.zeros((w2_width,), np.float32)
    w2p[:, :n_pool2] = w2f[:, 0::2]
    w2p[:, pad_half:pad_half + n_pool2] = w2f[:, 1::2]
    b2p[:n_pool2] = b2f[0::2]
    b2p[pad_half:pad_half + n_pool2] = b2f[1::2]

    # Pack all remaining small vectors into one contiguous (4, W) array.
    vw = max(L, w2_width, 128)
    vec = np.zeros((4, vw), np.float32)
    vec[0, :L] = b1p
    vec[1, :w2_width] = b2p
    vec[2, :n_pool2] = w3[:, 0]
    vec[3, 0] = b3.reshape(-1)[0]

    return dict(w1=jnp.asarray(w1p), w2=jnp.asarray(w2p), vec=jnp.asarray(vec))


# --------------------------------------------------------------------------- #
# Forward wrapper (jit this; the only op inside is the pallas_call)
# --------------------------------------------------------------------------- #
def vftc_forward(x_v, x_f1, x_f2, prepped, *, block_b=128):
    w1, w2, vec = prepped["w1"], prepped["w2"], prepped["vec"]
    B = x_v.shape[0]
    dv, df = x_v.shape[1], x_f1.shape[1]
    dim, L1 = w1.shape
    half1, W2 = w2.shape
    vw = vec.shape[1]

    # Batch tiling: multiple of 8 sublanes, up to block_b rows per tile.
    tb = min(block_b, _round_up(B, 8))
    bp = _round_up(B, tb)
    if bp != B:
        pad = ((0, bp - B), (0, 0))
        x_v = jnp.pad(x_v, pad)
        x_f1 = jnp.pad(x_f1, pad)
        x_f2 = jnp.pad(x_f2, pad)

    def batch_spec(d):
        return pl.BlockSpec((tb, d), lambda b: (b, 0))

    def resident_spec(shape):
        # Same block every grid step -> weights stay VMEM-resident.
        return pl.BlockSpec(shape, lambda b: (0, 0))

    out = pl.pallas_call(
        vftc_kernel,
        out_shape=jax.ShapeDtypeStruct((bp, 1), jnp.float32),
        grid=(bp // tb,),
        in_specs=[
            batch_spec(dv), batch_spec(df), batch_spec(df),
            resident_spec((dim, L1)),
            resident_spec((half1, W2)),
            resident_spec((4, vw)),
        ],
        out_specs=pl.BlockSpec((tb, 1), lambda b: (b, 0)),
        compiler_params=pltpu.CompilerParams(
            dimension_semantics=("parallel",)),
    )(x_v, x_f1, x_f2, w1, w2, vec)

    return out if bp == B else out[:B]


# --------------------------------------------------------------------------- #
# Deterministic init (matches PyTorch module shapes / defaults) + reference
# --------------------------------------------------------------------------- #
def init_params(key, dim, input_layer_size):
    L = input_layer_size
    ks = jax.random.split(key, 10)

    def linear_init(kw, kb, fan_in, fan_out):
        bound = 1.0 / np.sqrt(fan_in)
        w = jax.random.uniform(kw, (fan_in, fan_out), jnp.float32, -bound, bound)
        b = jax.random.uniform(kb, (fan_out,), jnp.float32, -bound, bound)
        return w, b

    w1, b1 = linear_init(ks[0], ks[1], dim, L)
    w2, b2 = linear_init(ks[2], ks[3], L // 2, L // 4)
    w3, b3 = linear_init(ks[4], ks[5], L // 8, 1)

    # Non-trivial BN stats so the BN-folding path is actually exercised.
    gamma = jax.random.uniform(ks[6], (L // 2,), jnp.float32, 0.5, 1.5)
    beta = 0.2 * jax.random.normal(ks[7], (L // 2,), jnp.float32)
    rmean = 0.2 * jax.random.normal(ks[8], (L // 2,), jnp.float32)
    rvar = jax.random.uniform(ks[9], (L // 2,), jnp.float32, 0.5, 1.5)

    return dict(w1=w1, b1=b1, w2=w2, b2=b2, w3=w3, b3=b3,
                gamma=gamma, beta=beta, running_mean=rmean, running_var=rvar)


def vftc_reference(x_v, x_f1, x_f2, params):
    """Pure-JAX reference (mirrors PyTorch eval-mode forward, unfolded)."""
    x = jnp.concatenate([x_v, x_f1, x_f2], axis=1)
    h = jnp.maximum(x @ params["w1"] + params["b1"], 0.0)
    B, L = h.shape
    h = h.reshape(B, L // 2, 2).max(axis=-1)
    h = ((h - params["running_mean"])
         / jnp.sqrt(params["running_var"] + BN_EPS)
         * params["gamma"] + params["beta"])
    h = jnp.maximum(h @ params["w2"] + params["b2"], 0.0)
    B, L4 = h.shape
    h = h.reshape(B, L4 // 2, 2).max(axis=-1)
    return h @ params["w3"] + params["b3"]


if __name__ == "__main__":
    B = 8
    INPUT_SZ_VOICE = 64
    INPUT_SZ_FACE = 32
    INPUT_LAYER_SIZE = 256
    dim = INPUT_SZ_VOICE + 2 * INPUT_SZ_FACE  # 128

    key = jax.random.PRNGKey(0)
    k_v, k_f1, k_f2, k_p = jax.random.split(key, 4)
    x_v = jax.random.normal(k_v, (B, INPUT_SZ_VOICE), jnp.float32)
    x_f1 = jax.random.normal(k_f1, (B, INPUT_SZ_FACE), jnp.float32)
    x_f2 = jax.random.normal(k_f2, (B, INPUT_SZ_FACE), jnp.float32)

    params = init_params(k_p, dim, INPUT_LAYER_SIZE)

    # One-time param prep (permute / BN-fold / pack) -- outside the hot path.
    prepped = prepare_params(params)

    fwd = jax.jit(functools.partial(vftc_forward))
    out = jax.block_until_ready(fwd(x_v, x_f1, x_f2, prepped))

    ref = vftc_reference(x_v, x_f1, x_f2, params)
    np.testing.assert_allclose(np.asarray(out), np.asarray(ref),
                               rtol=1e-3, atol=1e-3)
    assert out.shape == (B, 1)
    print("KERNEL_OK")
</pallas_src>

<mosaic_0001>
module attributes {stable_mosaic.version = 11 : i64} {
  func.func @vftc_kernel(%arg0: i32, %arg1: memref<8x64xf32, #tpu.memory_space<vmem>>, %arg2: memref<8x32xf32, #tpu.memory_space<vmem>>, %arg3: memref<8x32xf32, #tpu.memory_space<vmem>>, %arg4: memref<128x256xf32, #tpu.memory_space<vmem>>, %arg5: memref<128x256xf32, #tpu.memory_space<vmem>>, %arg6: memref<4x256xf32, #tpu.memory_space<vmem>>, %arg7: memref<8x1xf32, #tpu.memory_space<vmem>>) attributes {dimension_semantics = [#tpu.dimension_semantics<parallel>], iteration_bounds = array<i64: 1>, scalar_prefetch = 0 : i64, scratch_operands = 0 : i64, tpu.core_type = #tpu.core_type<tc>, window_params = [{transform_indices = @transform_0, window_bounds = array<i64: 8, 64>}, {transform_indices = @transform_1, window_bounds = array<i64: 8, 32>}, {transform_indices = @transform_2, window_bounds = array<i64: 8, 32>}, {pipeline_mode = #tpu.pipeline_mode<synchronous>, transform_indices = @transform_3, window_bounds = array<i64: 128, 256>}, {pipeline_mode = #tpu.pipeline_mode<synchronous>, transform_indices = @transform_4, window_bounds = array<i64: 128, 256>}, {pipeline_mode = #tpu.pipeline_mode<synchronous>, transform_indices = @transform_5, window_bounds = array<i64: 4, 256>}, {transform_indices = @transform_6, window_bounds = array<i64: 8, 1>}]} {
    %c0 = arith.constant 0 : index
    %c0_0 = arith.constant 0 : index
    %0 = vector.load %arg6[%c0, %c0_0] : memref<4x256xf32, #tpu.memory_space<vmem>>, vector<4x256xf32>
    %1 = vector.extract_strided_slice %0 {offsets = [0, 0], sizes = [1, 256], strides = [1, 1]} : vector<4x256xf32> to vector<1x256xf32>
    %2 = vector.extract_strided_slice %0 {offsets = [1, 0], sizes = [1, 256], strides = [1, 1]} : vector<4x256xf32> to vector<1x256xf32>
    %3 = vector.extract_strided_slice %0 {offsets = [2, 0], sizes = [1, 128], strides = [1, 1]} : vector<4x256xf32> to vector<1x128xf32>
    %4 = vector.extract_strided_slice %0 {offsets = [3, 0], sizes = [1, 1], strides = [1, 1]} : vector<4x256xf32> to vector<1x1xf32>
    %c0_1 = arith.constant 0 : index
    %c0_2 = arith.constant 0 : index
    %5 = vector.load %arg1[%c0_1, %c0_2] : memref<8x64xf32, #tpu.memory_space<vmem>>, vector<8x64xf32>
    %c0_3 = arith.constant 0 : index
    %c0_4 = arith.constant 0 : index
    %6 = vector.load %arg4[%c0_3, %c0_4] : memref<128x256xf32, #tpu.memory_space<vmem>>, vector<64x256xf32>
    %cst = arith.constant dense<0.000000e+00> : vector<8x256xf32>
    %7 = tpu.matmul %5, %6, %cst {dimension_numbers = #tpu.dot_dimension_numbers<[1], [0], [0], [1], [0, 0, 1, 1], [], []>} : vector<8x64xf32>, vector<64x256xf32>, vector<8x256xf32> -> vector<8x256xf32>
    %c0_5 = arith.constant 0 : index
    %c0_6 = arith.constant 0 : index
    %8 = vector.load %arg2[%c0_5, %c0_6] : memref<8x32xf32, #tpu.memory_space<vmem>>, vector<8x32xf32>
    %c64 = arith.constant 64 : index
    %c0_7 = arith.constant 0 : index
    %9 = vector.load %arg4[%c64, %c0_7] : memref<128x256xf32, #tpu.memory_space<vmem>>, vector<32x256xf32>
    %cst_8 = arith.constant dense<0.000000e+00> : vector<8x256xf32>
    %10 = tpu.matmul %8, %9, %cst_8 {dimension_numbers = #tpu.dot_dimension_numbers<[1], [0], [0], [1], [0, 0, 1, 1], [], []>} : vector<8x32xf32>, vector<32x256xf32>, vector<8x256xf32> -> vector<8x256xf32>
    %11 = arith.addf %7, %10 : vector<8x256xf32>
    %c0_9 = arith.constant 0 : index
    %c0_10 = arith.constant 0 : index
    %12 = vector.load %arg3[%c0_9, %c0_10] : memref<8x32xf32, #tpu.memory_space<vmem>>, vector<8x32xf32>
    %c96 = arith.constant 96 : index
    %c0_11 = arith.constant 0 : index
    %13 = vector.load %arg4[%c96, %c0_11] : memref<128x256xf32, #tpu.memory_space<vmem>>, vector<32x256xf32>
    %cst_12 = arith.constant dense<0.000000e+00> : vector<8x256xf32>
    %14 = tpu.matmul %12, %13, %cst_12 {dimension_numbers = #tpu.dot_dimension_numbers<[1], [0], [0], [1], [0, 0, 1, 1], [], []>} : vector<8x32xf32>, vector<32x256xf32>, vector<8x256xf32> -> vector<8x256xf32>
    %15 = arith.addf %11, %14 : vector<8x256xf32>
    %16 = vector.broadcast %1 : vector<1x256xf32> to vector<8x256xf32>
    %17 = arith.addf %15, %16 : vector<8x256xf32>
    %cst_13 = arith.constant 0.000000e+00 : f32
    %18 = vector.broadcast %cst_13 : f32 to vector<8x256xf32>
    %19 = arith.maximumf %17, %18 : vector<8x256xf32>
    %20 = vector.extract_strided_slice %19 {offsets = [0, 0], sizes = [8, 128], strides = [1, 1]} : vector<8x256xf32> to vector<8x128xf32>
    %21 = vector.extract_strided_slice %19 {offsets = [0, 128], sizes = [8, 128], strides = [1, 1]} : vector<8x256xf32> to vector<8x128xf32>
    %22 = arith.maximumf %20, %21 : vector<8x128xf32>
    %c0_14 = arith.constant 0 : index
    %c0_15 = arith.constant 0 : index
    %23 = vector.load %arg5[%c0_14, %c0_15] : memref<128x256xf32, #tpu.memory_space<vmem>>, vector<128x256xf32>
    %cst_16 = arith.constant dense<0.000000e+00> : vector<8x256xf32>
    %24 = tpu.matmul %22, %23, %cst_16 {dimension_numbers = #tpu.dot_dimension_numbers<[1], [0], [0], [1], [0, 0, 1, 1], [], []>} : vector<8x128xf32>, vector<128x256xf32>, vector<8x256xf32> -> vector<8x256xf32>
    %25 = vector.broadcast %2 : vector<1x256xf32> to vector<8x256xf32>
    %26 = arith.addf %24, %25 : vector<8x256xf32>
    %cst_17 = arith.constant 0.000000e+00 : f32
    %27 = vector.broadcast %cst_17 : f32 to vector<8x256xf32>
    %28 = arith.maximumf %26, %27 : vector<8x256xf32>
    %29 = vector.extract_strided_slice %28 {offsets = [0, 0], sizes = [8, 128], strides = [1, 1]} : vector<8x256xf32> to vector<8x128xf32>
    %30 = vector.extract_strided_slice %28 {offsets = [0, 128], sizes = [8, 128], strides = [1, 1]} : vector<8x256xf32> to vector<8x128xf32>
    %31 = arith.maximumf %29, %30 : vector<8x128xf32>
    %32 = vector.broadcast %3 : vector<1x128xf32> to vector<8x128xf32>
    %33 = arith.mulf %31, %32 : vector<8x128xf32>
    %cst_18 = arith.constant dense<0.000000e+00> : vector<8xf32>
    %34 = vector.multi_reduction <add>, %33, %cst_18 [1] : vector<8x128xf32> to vector<8xf32>
    %35 = vector.shape_cast %34 : vector<8xf32> to vector<8x1xf32>
    %36 = vector.broadcast %4 : vector<1x1xf32> to vector<8x1xf32>
    %37 = arith.addf %35, %36 : vector<8x1xf32>
    %c0_19 = arith.constant 0 : index
    %c0_20 = arith.constant 0 : index
    %38 = vector.load %arg7[%c0_19, %c0_20] : memref<8x1xf32, #tpu.memory_space<vmem>>, vector<8x1xf32>
    tpu.vector_store %arg7[%c0_19, %c0_20], %37 {strides = array<i32>} : memref<8x1xf32, #tpu.memory_space<vmem>>, vector<8x1xf32>,
    return
  }
  func.func @transform_0(%arg0: i32) -> (i32, i32) {
    %c0_i32 = arith.constant 0 : i32
    %c0_i32_0 = arith.constant 0 : i32
    return %arg0, %c0_i32 : i32, i32
  }
  func.func @transform_1(%arg0: i32) -> (i32, i32) {
    %c0_i32 = arith.constant 0 : i32
    %c0_i32_0 = arith.constant 0 : i32
    return %arg0, %c0_i32 : i32, i32
  }
  func.func @transform_2(%arg0: i32) -> (i32, i32) {
    %c0_i32 = arith.constant 0 : i32
    %c0_i32_0 = arith.constant 0 : i32
    return %arg0, %c0_i32 : i32, i32
  }
  func.func @transform_3(%arg0: i32) -> (i32, i32) {
    %c0_i32 = arith.constant 0 : i32
    %c0_i32_0 = arith.constant 0 : i32
    %c0_i32_1 = arith.constant 0 : i32
    return %c0_i32, %c0_i32_0 : i32, i32
  }
  func.func @transform_4(%arg0: i32) -> (i32, i32) {
    %c0_i32 = arith.constant 0 : i32
    %c0_i32_0 = arith.constant 0 : i32
    %c0_i32_1 = arith.constant 0 : i32
    return %c0_i32, %c0_i32_0 : i32, i32
  }
  func.func @transform_5(%arg0: i32) -> (i32, i32) {
    %c0_i32 = arith.constant 0 : i32
    %c0_i32_0 = arith.constant 0 : i32
    %c0_i32_1 = arith.constant 0 : i32
    return %c0_i32, %c0_i32_0 : i32, i32
  }
  func.func @transform_6(%arg0: i32) -> (i32, i32) {
    %c0_i32 = arith.constant 0 : i32
    %c0_i32_0 = arith.constant 0 : i32
    return %arg0, %c0_i32 : i32, i32
  }
}

</mosaic_0001>

<llo_original>
// kernel: vftc_forward.1
$region0: #{vftc_forward.1}
  #allocation0 [shape = 'u32[]', space=smem, size = 0x4, offset = 0x4, fixed_abs, tag = 'smem constant byte address 0x4 - core index']
  #allocation1 [shape = 'u32[144,128]{1,0:T(1,128)}', space=vmem, size = 0x12000, scoped, tag = 'internal scratch']
  %s0 = inlined_call_operand.hbm [shape: f32[8,64], index: 0, kind: input, shape index: {}]
  %s1 = inlined_call_operand.hbm [shape: f32[8,32], index: 1, kind: input, shape index: {}]
  %s2 = inlined_call_operand.hbm [shape: f32[8,32], index: 2, kind: input, shape index: {}]
  %s3 = inlined_call_operand.hbm [shape: f32[128,256], index: 3, kind: input, shape index: {}]
  %s4 = inlined_call_operand.hbm [shape: f32[128,256], index: 4, kind: input, shape index: {}]
  %s5 = inlined_call_operand.hbm [shape: f32[4,256], index: 5, kind: input, shape index: {}]
  %s6 = inlined_call_operand.vmem [shape: f32[8,1], index: 6, kind: output, shape index: {}]
  %s7 = sld [smem:[#allocation0]]
  $region58: #{vftc_forward.1} parent=0
    _
  %s9 = ssub.s32 1, %s7
  %s10 = scalar_select 0, %s9, %s7
  $region1: #{vftc_forward.1} parent=0
    #allocation2 [shape = 'u8[4096]{0}', space=vmem, size = 0x1000, scoped, tag = 'input window, operand 0, single buffered']
    #allocation3 [shape = 's32[1]{0}', space=sflag, size = 0x4, scoped, tag = 'scoped memory for vftc_forward.1']
    #allocation4 [shape = 'u8[4096]{0}', space=vmem, size = 0x1000, scoped, tag = 'input window, operand 1, single buffered']
    #allocation5 [shape = 's32[1]{0}', space=sflag, size = 0x4, scoped, tag = 'scoped memory for vftc_forward.1']
    #allocation6 [shape = 'u8[4096]{0}', space=vmem, size = 0x1000, scoped, tag = 'input window, operand 2, single buffered']
    #allocation7 [shape = 'u8[131072]{0}', space=vmem, size = 0x20000, scoped, tag = 'input window, operand 3, single buffered']
    #allocation8 [shape = 's32[1]{0}', space=sflag, size = 0x4, scoped, tag = 'scoped memory for vftc_forward.1']
    #allocation9 [shape = 'u8[131072]{0}', space=vmem, size = 0x20000, scoped, tag = 'input window, operand 4, single buffered']
    #allocation10 [shape = 'u8[4096]{0}', space=vmem, size = 0x1000, scoped, tag = 'input window, operand 5, single buffered']
    #allocation11 [shape = 's32[1]{0}', space=sflag, size = 0x4, scoped, tag = 'scoped memory for vftc_forward.1']
    %11 = vsyncpa [#allocation3], 0
    %12 = vsyncpa [#allocation5], 0
    %13 = vsyncpa [#allocation8], 0
    %14 = vsyncpa [#allocation11], 0
    // Predicated region
    $region2: #{vftc_forward.1} parent=1 // pred_check
      _
    $region3: #{vftc_forward.1} parent=1 // pred_check_branch
      %16 = sbr.rel (0) target = $region5
    $region4: #{vftc_forward.1} parent=1 // pred_region
      %s18 = ssub.s32 128, 128
      %19 = vsyncadd [#allocation3], %s18
      %s21 = sshll.u32 [#allocation2], 4
      %s22 = int_to_ptr.vmem [resolvable:$true] %s21
      %24 = dma.hbm_to_vmem [thread:$0]  %s0, 128, %s22, [#allocation3]
    $region5: #{vftc_forward.1} parent=1 // pred_fallthru
      _
    // Predicated region
    $region6: #{vftc_forward.1} parent=1 // pred_check
      _
    $region7: #{vftc_forward.1} parent=1 // pred_check_branch
      %26 = sbr.rel (0) target = $region9
    $region8: #{vftc_forward.1} parent=1 // pred_region
      %s28 = ssub.s32 128, 128
      %29 = vsyncadd [#allocation5], %s28
      %s31 = sshll.u32 [#allocation4], 4
      %s32 = int_to_ptr.vmem [resolvable:$true] %s31
      %34 = dma.hbm_to_vmem [thread:$0]  %s1, 128, %s32, [#allocation5]
    $region9: #{vftc_forward.1} parent=1 // pred_fallthru
      _
    // Predicated region
    $region10: #{vftc_forward.1} parent=1 // pred_check
      _
    $region11: #{vftc_forward.1} parent=1 // pred_check_branch
      %36 = sbr.rel (0) target = $region13
    $region12: #{vftc_forward.1} parent=1 // pred_region
      %s38 = ssub.s32 128, 128
      %39 = vsyncadd [#allocation5], %s38
      %s41 = sshll.u32 [#allocation6], 4
      %s42 = int_to_ptr.vmem [resolvable:$true] %s41
      %44 = dma.hbm_to_vmem [thread:$0]  %s2, 128, %s42, [#allocation5]
    $region13: #{vftc_forward.1} parent=1 // pred_fallthru
      _
    // Predicated region
    $region14: #{vftc_forward.1} parent=1 // pred_check
      _
    $region15: #{vftc_forward.1} parent=1 // pred_check_branch
      %46 = sbr.rel (0) target = $region17
    $region16: #{vftc_forward.1} parent=1 // pred_region
      %s48 = ssub.s32 4096, 4096
      %49 = vsyncadd [#allocation8], %s48
      %s50 = sshll.u32 [#allocation7], 4
      %s51 = int_to_ptr.vmem [resolvable:$true] %s50
      %56 = dma.hbm_to_vmem [thread:$0]  %s3, 4096, %s51, [#allocation8], 256, 256, 16
    $region17: #{vftc_forward.1} parent=1 // pred_fallthru
      _
    // Predicated region
    $region18: #{vftc_forward.1} parent=1 // pred_check
      _
    $region19: #{vftc_forward.1} parent=1 // pred_check_branch
      %58 = sbr.rel (0) target = $region21
    $region20: #{vftc_forward.1} parent=1 // pred_region
      %s60 = ssub.s32 4096, 4096
      %61 = vsyncadd [#allocation8], %s60
      %s62 = sshll.u32 [#allocation9], 4
      %s63 = int_to_ptr.vmem [resolvable:$true] %s62
      %68 = dma.hbm_to_vmem [thread:$0]  %s4, 4096, %s63, [#allocation8], 256, 256, 16
    $region21: #{vftc_forward.1} parent=1 // pred_fallthru
      _
    // Predicated region
    $region22: #{vftc_forward.1} parent=1 // pred_check
      _
    $region23: #{vftc_forward.1} parent=1 // pred_check_branch
      %70 = sbr.rel (0) target = $region25
    $region24: #{vftc_forward.1} parent=1 // pred_region
      %s72 = ssub.s32 128, 128
      %73 = vsyncadd [#allocation11], %s72
      %s75 = sshll.u32 [#allocation10], 4
      %s76 = int_to_ptr.vmem [resolvable:$true] %s75
      %78 = dma.hbm_to_vmem [thread:$0]  %s5, 128, %s76, [#allocation11]
    $region25: #{vftc_forward.1} parent=1 // pred_fallthru
      _
    // Predicated region
    $region26: #{vftc_forward.1} parent=1 // pred_check
      _
    $region27: #{vftc_forward.1} parent=1 // pred_check_branch
      %80 = sbr.rel (0) target = $region29
    $region28: #{vftc_forward.1} parent=1 // pred_region
      %81 = dma.done [#allocation3], 128
    $region29: #{vftc_forward.1} parent=1 // pred_fallthru
      _
    // Predicated region
    $region30: #{vftc_forward.1} parent=1 // pred_check
      _
    $region31: #{vftc_forward.1} parent=1 // pred_check_branch
      %83 = sbr.rel (0) target = $region33
    $region32: #{vftc_forward.1} parent=1 // pred_region
      %84 = dma.done [#allocation5], 128
    $region33: #{vftc_forward.1} parent=1 // pred_fallthru
      _
    // Predicated region
    $region34: #{vftc_forward.1} parent=1 // pred_check
      _
    $region35: #{vftc_forward.1} parent=1 // pred_check_branch
      %86 = sbr.rel (0) target = $region37
    $region36: #{vftc_forward.1} parent=1 // pred_region
      %87 = dma.done [#allocation5], 128
    $region37: #{vftc_forward.1} parent=1 // pred_fallthru
      _
    // Predicated region
    $region38: #{vftc_forward.1} parent=1 // pred_check
      _
    $region39: #{vftc_forward.1} parent=1 // pred_check_branch
      %89 = sbr.rel (0) target = $region41
    $region40: #{vftc_forward.1} parent=1 // pred_region
      %90 = dma.done [#allocation8], 4096
    $region41: #{vftc_forward.1} parent=1 // pred_fallthru
      _
    // Predicated region
    $region42: #{vftc_forward.1} parent=1 // pred_check
      _
    $region43: #{vftc_forward.1} parent=1 // pred_check_branch
      %92 = sbr.rel (0) target = $region45
    $region44: #{vftc_forward.1} parent=1 // pred_region
      %93 = dma.done [#allocation8], 4096
    $region45: #{vftc_forward.1} parent=1 // pred_fallthru
      _
    // Predicated region
    $region46: #{vftc_forward.1} parent=1 // pred_check
      _
    $region47: #{vftc_forward.1} parent=1 // pred_check_branch
      %95 = sbr.rel (0) target = $region49
    $region48: #{vftc_forward.1} parent=1 // pred_region
      %96 = dma.done [#allocation11], 128
    $region49: #{vftc_forward.1} parent=1 // pred_fallthru
      _
    %v97 = vld [vmem:[#allocation10] sm:$0xff]
    %v98 = vld [vmem:[#allocation2] sm:$0xff]
    %v99 = vld [vmem:[#allocation7] sm:$0xff]
    %v100 = vld [vmem:[#allocation7 + $0x8] sm:$0xff]
    %v101 = vld [vmem:[#allocation7 + $0x10] sm:$0xff]
    %v102 = vld [vmem:[#allocation7 + $0x18] sm:$0xff]
    %v103 = vld [vmem:[#allocation7 + $0x20] sm:$0xff]
    %v104 = vld [vmem:[#allocation7 + $0x28] sm:$0xff]
    %v105 = vld [vmem:[#allocation7 + $0x30] sm:$0xff]
    %v106 = vld [vmem:[#allocation7 + $0x38] sm:$0xff]
    %v107 = vld [vmem:[#allocation7 + $0x40] sm:$0xff]
    %v108 = vld [vmem:[#allocation7 + $0x48] sm:$0xff]
    %v109 = vld [vmem:[#allocation7 + $0x50] sm:$0xff]
    %v110 = vld [vmem:[#allocation7 + $0x58] sm:$0xff]
    %v111 = vld [vmem:[#allocation7 + $0x60] sm:$0xff]
    %v112 = vld [vmem:[#allocation7 + $0x68] sm:$0xff]
    %v113 = vld [vmem:[#allocation7 + $0x70] sm:$0xff]
    %v114 = vld [vmem:[#allocation7 + $0x78] sm:$0xff]
    %v115 = vld [vmem:[#allocation4] sm:$0xff]
    %v116 = vld [vmem:[#allocation7 + $0x80] sm:$0xff]
    %v117 = vld [vmem:[#allocation7 + $0x88] sm:$0xff]
    %v118 = vld [vmem:[#allocation7 + $0x90] sm:$0xff]
    %v119 = vld [vmem:[#allocation7 + $0x98] sm:$0xff]
    %v120 = vld [vmem:[#allocation7 + $0xa0] sm:$0xff]
    %v121 = vld [vmem:[#allocation7 + $0xa8] sm:$0xff]
    %v122 = vld [vmem:[#allocation7 + $0xb0] sm:$0xff]
    %v123 = vld [vmem:[#allocation7 + $0xb8] sm:$0xff]
    %vm124 = vcmask 261120
    %v126 = vsel %vm124, %v115, 0
    %128 = vmatprep.subr.mxu0 0.0
    %129 = vmatpush1.msra.mxu0 0.0
    %130 = vmatprep.subr.mxu0 0.0
    %131 = vmatpush1.msra.mxu0 0.0
    %132 = vmatprep.subr.mxu0 0.0
    %133 = vmatpush1.msra.mxu0 0.0
    %134 = vmatprep.subr.mxu0 0.0
    %135 = vmatpush1.msra.mxu0 0.0
    %136 = vmatprep.subr.mxu0 0.0
    %137 = vmatpush1.msra.mxu0 0.0
    %138 = vmatprep.subr.mxu0 0.0
    %139 = vmatpush1.msra.mxu0 0.0
    %140 = vmatprep.subr.mxu0 0.0
    %141 = vmatpush1.msra.mxu0 0.0
    %142 = vmatprep.subr.mxu0 0.0
    %143 = vmatpush1.msra.mxu0 0.0
    %144 = vmatprep.subr.mxu0 0.0
    %145 = vmatpush1.msra.mxu0 0.0
    %146 = vmatprep.subr.mxu0 0.0
    %147 = vmatpush1.msra.mxu0 0.0
    %148 = vmatprep.subr.mxu0 0.0
    %149 = vmatpush1.msra.mxu0 0.0
    %150 = vmatprep.subr.mxu0 0.0
    %151 = vmatpush1.msra.mxu0 0.0
    %152 = vmatprep.subr.mxu0 %v123
    %153 = vmatpush1.msra.mxu0 %v122
    %154 = vmatprep.subr.mxu0 %v121
    %155 = vmatpush1.msra.mxu0 %v120
    %156 = vmatprep.subr.mxu0 %v119
    %157 = vmatpush1.msra.mxu0 %v118
    %158 = vmatprep.subr.mxu0 %v117
    %159 = vmatpush1.msra.mxu0 %v116
    %160 = vmatprep.subr.mxu0 0.0
    %161 = vmatpush2.msra.mxu0 0.0
    %162 = vmatprep.subr.mxu0 0.0
    %163 = vmatpush2.msra.mxu0 0.0
    %164 = vmatprep.subr.mxu0 0.0
    %165 = vmatpush2.msra.mxu0 0.0
    %166 = vmatprep.subr.mxu0 0.0
    %167 = vmatpush2.msra.mxu0 0.0
    %168 = vmatprep.subr.mxu0 0.0
    %169 = vmatpush2.msra.mxu0 0.0
    %170 = vmatprep.subr.mxu0 0.0
    %171 = vmatpush2.msra.mxu0 0.0
    %172 = vmatprep.subr.mxu0 0.0
    %173 = vmatpush2.msra.mxu0 0.0
    %174 = vmatprep.subr.mxu0 0.0
    %175 = vmatpush2.msra.mxu0 0.0
    %176 = vmatprep.subr.mxu0 0.0
    %177 = vmatpush2.msra.mxu0 0.0
    %178 = vmatprep.subr.mxu0 0.0
    %179 = vmatpush2.msra.mxu0 0.0
    %180 = vmatprep.subr.mxu0 0.0
    %181 = vmatpush2.msra.mxu0 0.0
    %182 = vmatprep.subr.mxu0 0.0
    %183 = vmatpush2.msra.mxu0 0.0
    %184 = vmatprep.subr.mxu0 0.0
    %185 = vmatpush2.msra.mxu0 0.0
    %186 = vmatprep.subr.mxu0 0.0
    %187 = vmatpush2.msra.mxu0 0.0
    %188 = vmatprep.subr.mxu0 0.0
    %189 = vmatpush2.msra.mxu0 0.0
    %190 = vmatprep.subr.mxu0 0.0
    %191 = vmatpush2.msra.mxu0 0.0
    %192 = vmatprep.mubr.f32.mxu0 0.0
    %193 = vmatmul.mubr.f32.gmra.mxu0 %v126
    %v194 = vpop.f32.mrf.mxu0
    %v195 = vadd.f32 0.0, %v194
    %v196 = vpop.f32.mrf.mxu0
    %v197 = vadd.f32 0.0, %v196
    %198 = vdwg.mxu0
    %vm199 = vcmask 523264
    %v201 = vsel %vm199, %v98, 0
    %203 = vmatprep.subr.mxu0 0.0
    %204 = vmatpush1.msra.mxu0 0.0
    %205 = vmatprep.subr.mxu0 0.0
    %206 = vmatpush1.msra.mxu0 0.0
    %207 = vmatprep.subr.mxu0 0.0
    %208 = vmatpush1.msra.mxu0 0.0
    %209 = vmatprep.subr.mxu0 0.0
    %210 = vmatpush1.msra.mxu0 0.0
    %211 = vmatprep.subr.mxu0 0.0
    %212 = vmatpush1.msra.mxu0 0.0
    %213 = vmatprep.subr.mxu0 0.0
    %214 = vmatpush1.msra.mxu0 0.0
    %215 = vmatprep.subr.mxu0 0.0
    %216 = vmatpush1.msra.mxu0 0.0
    %217 = vmatprep.subr.mxu0 0.0
    %218 = vmatpush1.msra.mxu0 0.0
    %219 = vmatprep.subr.mxu0 %v114
    %220 = vmatpush1.msra.mxu0 %v113
    %221 = vmatprep.subr.mxu0 %v112
    %222 = vmatpush1.msra.mxu0 %v111
    %223 = vmatprep.subr.mxu0 %v110
    %224 = vmatpush1.msra.mxu0 %v109
    %225 = vmatprep.subr.mxu0 %v108
    %226 = vmatpush1.msra.mxu0 %v107
    %227 = vmatprep.subr.mxu0 %v106
    %228 = vmatpush1.msra.mxu0 %v105
    %229 = vmatprep.subr.mxu0 %v104
    %230 = vmatpush1.msra.mxu0 %v103
    %231 = vmatprep.subr.mxu0 %v102
    %232 = vmatpush1.msra.mxu0 %v101
    %233 = vmatprep.subr.mxu0 %v100
    %234 = vmatpush1.msra.mxu0 %v99
    %235 = vmatprep.subr.mxu0 0.0
    %236 = vmatpush2.msra.mxu0 0.0
    %237 = vmatprep.subr.mxu0 0.0
    %238 = vmatpush2.msra.mxu0 0.0
    %239 = vmatprep.subr.mxu0 0.0
    %240 = vmatpush2.msra.mxu0 0.0
    %241 = vmatprep.subr.mxu0 0.0
    %242 = vmatpush2.msra.mxu0 0.0
    %243 = vmatprep.subr.mxu0 0.0
    %244 = vmatpush2.msra.mxu0 0.0
    %245 = vmatprep.subr.mxu0 0.0
    %246 = vmatpush2.msra.mxu0 0.0
    %247 = vmatprep.subr.mxu0 0.0
    %248 = vmatpush2.msra.mxu0 0.0
    %249 = vmatprep.subr.mxu0 0.0
    %250 = vmatpush2.msra.mxu0 0.0
    %251 = vmatprep.subr.mxu0 0.0
    %252 = vmatpush2.msra.mxu0 0.0
    %253 = vmatprep.subr.mxu0 0.0
    %254 = vmatpush2.msra.mxu0 0.0
    %255 = vmatprep.subr.mxu0 0.0
    %256 = vmatpush2.msra.mxu0 0.0
    %257 = vmatprep.subr.mxu0 0.0
    %258 = vmatpush2.msra.mxu0 0.0
    %259 = vmatprep.subr.mxu0 0.0
    %260 = vmatpush2.msra.mxu0 0.0
    %261 = vmatprep.subr.mxu0 0.0
    %262 = vmatpush2.msra.mxu0 0.0
    %263 = vmatprep.subr.mxu0 0.0
    %264 = vmatpush2.msra.mxu0 0.0
    %265 = vmatprep.subr.mxu0 0.0
    %266 = vmatpush2.msra.mxu0 0.0
    %267 = vmatprep.mubr.f32.mxu0 0.0
    %268 = vmatmul.mubr.f32.gmra.mxu0 %v201
    %v269 = vpop.f32.mrf.mxu0
    %v270 = vadd.f32 %v195, %v269
    %v271 = vpop.f32.mrf.mxu0
    %v272 = vadd.f32 %v197, %v271
    %273 = vdwg.mxu0
    %v274 = vld [vmem:[#allocation6] sm:$0xff]
    %v275 = vld [vmem:[#allocation7 + $0xc0] sm:$0xff]
    %v276 = vld [vmem:[#allocation7 + $0xc8] sm:$0xff]
    %v277 = vld [vmem:[#allocation7 + $0xd0] sm:$0xff]
    %v278 = vld [vmem:[#allocation7 + $0xd8] sm:$0xff]
    %v279 = vld [vmem:[#allocation7 + $0xe0] sm:$0xff]
    %v280 = vld [vmem:[#allocation7 + $0xe8] sm:$0xff]
    %v281 = vld [vmem:[#allocation7 + $0xf0] sm:$0xff]
    %v282 = vld [vmem:[#allocation7 + $0xf8] sm:$0xff]
    %v284 = vsel %vm124, %v274, 0
    %286 = vmatprep.subr.mxu0 0.0
    %287 = vmatpush1.msra.mxu0 0.0
    %288 = vmatprep.subr.mxu0 0.0
    %289 = vmatpush1.msra.mxu0 0.0
    %290 = vmatprep.subr.mxu0 0.0
    %291 = vmatpush1.msra.mxu0 0.0
    %292 = vmatprep.subr.mxu0 0.0
    %293 = vmatpush1.msra.mxu0 0.0
    %294 = vmatprep.subr.mxu0 0.0
    %295 = vmatpush1.msra.mxu0 0.0
    %296 = vmatprep.subr.mxu0 0.0
    %297 = vmatpush1.msra.mxu0 0.0
    %298 = vmatprep.subr.mxu0 0.0
    %299 = vmatpush1.msra.mxu0 0.0
    %300 = vmatprep.subr.mxu0 0.0
    %301 = vmatpush1.msra.mxu0 0.0
    %302 = vmatprep.subr.mxu0 0.0
    %303 = vmatpush1.msra.mxu0 0.0
    %304 = vmatprep.subr.mxu0 0.0
    %305 = vmatpush1.msra.mxu0 0.0
    %306 = vmatprep.subr.mxu0 0.0
    %307 = vmatpush1.msra.mxu0 0.0
    %308 = vmatprep.subr.mxu0 0.0
    %309 = vmatpush1.msra.mxu0 0.0
    %310 = vmatprep.subr.mxu0 %v282
    %311 = vmatpush1.msra.mxu0 %v281
    %312 = vmatprep.subr.mxu0 %v280
    %313 = vmatpush1.msra.mxu0 %v279
    %314 = vmatprep.subr.mxu0 %v278
    %315 = vmatpush1.msra.mxu0 %v277
    %316 = vmatprep.subr.mxu0 %v276
    %317 = vmatpush1.msra.mxu0 %v275
    %318 = vmatprep.subr.mxu0 0.0
    %319 = vmatpush2.msra.mxu0 0.0
    %320 = vmatprep.subr.mxu0 0.0
    %321 = vmatpush2.msra.mxu0 0.0
    %322 = vmatprep.subr.mxu0 0.0
    %323 = vmatpush2.msra.mxu0 0.0
    %324 = vmatprep.subr.mxu0 0.0
    %325 = vmatpush2.msra.mxu0 0.0
    %326 = vmatprep.subr.mxu0 0.0
    %327 = vmatpush2.msra.mxu0 0.0
    %328 = vmatprep.subr.mxu0 0.0
    %329 = vmatpush2.msra.mxu0 0.0
    %330 = vmatprep.subr.mxu0 0.0
    %331 = vmatpush2.msra.mxu0 0.0
    %332 = vmatprep.subr.mxu0 0.0
    %333 = vmatpush2.msra.mxu0 0.0
    %334 = vmatprep.subr.mxu0 0.0
    %335 = vmatpush2.msra.mxu0 0.0
    %336 = vmatprep.subr.mxu0 0.0
    %337 = vmatpush2.msra.mxu0 0.0
    %338 = vmatprep.subr.mxu0 0.0
    %339 = vmatpush2.msra.mxu0 0.0
    %340 = vmatprep.subr.mxu0 0.0
    %341 = vmatpush2.msra.mxu0 0.0
    %342 = vmatprep.subr.mxu0 0.0
    %343 = vmatpush2.msra.mxu0 0.0
    %344 = vmatprep.subr.mxu0 0.0
    %345 = vmatpush2.msra.mxu0 0.0
    %346 = vmatprep.subr.mxu0 0.0
    %347 = vmatpush2.msra.mxu0 0.0
    %348 = vmatprep.subr.mxu0 0.0
    %349 = vmatpush2.msra.mxu0 0.0
    %350 = vmatprep.mubr.f32.mxu0 0.0
    %351 = vmatmul.mubr.f32.gmra.mxu0 %v284
    %v352 = vpop.f32.mrf.mxu0
    %v353 = vadd.f32 0.0, %v352
    %v354 = vpop.f32.mrf.mxu0
    %v355 = vadd.f32 0.0, %v354
    %356 = vdwg.mxu0
    %v357 = vadd.f32 %v270, %v353
    %v358 = vadd.f32 %v272, %v355
    %v360 = vlaneseq
    %v361 = vshrl.u32 %v360, 7
    %v362 = vsub.s32 0, %v361
    %v363 = vrot.slane %v97, %v362
    %v364 = vlaneseq
    %v365 = vshrl.u32 %v364, 7
    %v366 = vsub.s32 4, %v365
    %v367 = vrot.slane %v97, %v366
    %v370 = vlaneseq
    %v371 = vshrl.u32 %v370, 7
    %v372 = vsub.s32 0, %v371
    %v373 = vrot.slane %v363, %v372
    %v374 = vlaneseq
    %v375 = vshrl.u32 %v374, 7
    %v376 = vsub.s32 0, %v375
    %v377 = vrot.slane %v367, %v376
    %v378 = vadd.f32 %v357, %v373
    %v379 = vadd.f32 %v358, %v377
    %v380 = vmax.f32 %v378, 0.0
    %v381 = vmax.f32 %v379, 0.0
    %v382 = vmax.f32 %v380, %v381
    %v383 = vld [vmem:[#allocation9] sm:$0xff]
    %v384 = vld [vmem:[#allocation9 + $0x8] sm:$0xff]
    %v385 = vld [vmem:[#allocation9 + $0x10] sm:$0xff]
    %v386 = vld [vmem:[#allocation9 + $0x18] sm:$0xff]
    %v387 = vld [vmem:[#allocation9 + $0x20] sm:$0xff]
    %v388 = vld [vmem:[#allocation9 + $0x28] sm:$0xff]
    %v389 = vld [vmem:[#allocation9 + $0x30] sm:$0xff]
    %v390 = vld [vmem:[#allocation9 + $0x38] sm:$0xff]
    %v391 = vld [vmem:[#allocation9 + $0x40] sm:$0xff]
    %v392 = vld [vmem:[#allocation9 + $0x48] sm:$0xff]
    %v393 = vld [vmem:[#allocation9 + $0x50] sm:$0xff]
    %v394 = vld [vmem:[#allocation9 + $0x58] sm:$0xff]
    %v395 = vld [vmem:[#allocation9 + $0x60] sm:$0xff]
    %v396 = vld [vmem:[#allocation9 + $0x68] sm:$0xff]
    %v397 = vld [vmem:[#allocation9 + $0x70] sm:$0xff]
    %v398 = vld [vmem:[#allocation9 + $0x78] sm:$0xff]
    %v399 = vld [vmem:[#allocation9 + $0x80] sm:$0xff]
    %v400 = vld [vmem:[#allocation9 + $0x88] sm:$0xff]
    %v401 = vld [vmem:[#allocation9 + $0x90] sm:$0xff]
    %v402 = vld [vmem:[#allocation9 + $0x98] sm:$0xff]
    %v403 = vld [vmem:[#allocation9 + $0xa0] sm:$0xff]
    %v404 = vld [vmem:[#allocation9 + $0xa8] sm:$0xff]
    %v405 = vld [vmem:[#allocation9 + $0xb0] sm:$0xff]
    %v406 = vld [vmem:[#allocation9 + $0xb8] sm:$0xff]
    %v407 = vld [vmem:[#allocation9 + $0xc0] sm:$0xff]
    %v408 = vld [vmem:[#allocation9 + $0xc8] sm:$0xff]
    %v409 = vld [vmem:[#allocation9 + $0xd0] sm:$0xff]
    %v410 = vld [vmem:[#allocation9 + $0xd8] sm:$0xff]
    %v411 = vld [vmem:[#allocation9 + $0xe0] sm:$0xff]
    %v412 = vld [vmem:[#allocation9 + $0xe8] sm:$0xff]
    %v413 = vld [vmem:[#allocation9 + $0xf0] sm:$0xff]
    %v414 = vld [vmem:[#allocation9 + $0xf8] sm:$0xff]
    %v415 = vlaneseq
    %v416 = vshrl.u32 %v415, 7
    %v417 = vsub.s32 1, %v416
    %v418 = vrot.slane %v97, %v417
    %v419 = vlaneseq
    %v420 = vshrl.u32 %v419, 7
    %v421 = vsub.s32 5, %v420
    %v422 = vrot.slane %v97, %v421
    %v425 = vlaneseq
    %v426 = vshrl.u32 %v425, 7
    %v427 = vsub.s32 1, %v426
    %v428 = vrot.slane %v418, %v427
    %v429 = vlaneseq
    %v430 = vshrl.u32 %v429, 7
    %v431 = vsub.s32 1, %v430
    %v432 = vrot.slane %v422, %v431
    %433 = vmatprep.subr.mxu0 %v414
    %434 = vmatpush1.msra.mxu0 %v413
    %435 = vmatprep.subr.mxu0 %v412
    %436 = vmatpush1.msra.mxu0 %v411
    %437 = vmatprep.subr.mxu0 %v410
    %438 = vmatpush1.msra.mxu0 %v409
    %439 = vmatprep.subr.mxu0 %v408
    %440 = vmatpush1.msra.mxu0 %v407
    %441 = vmatprep.subr.mxu0 %v406
    %442 = vmatpush1.msra.mxu0 %v405
    %443 = vmatprep.subr.mxu0 %v404
    %444 = vmatpush1.msra.mxu0 %v403
    %445 = vmatprep.subr.mxu0 %v402
    %446 = vmatpush1.msra.mxu0 %v401
    %447 = vmatprep.subr.mxu0 %v400
    %448 = vmatpush1.msra.mxu0 %v399
    %449 = vmatprep.subr.mxu0 %v398
    %450 = vmatpush1.msra.mxu0 %v397
    %451 = vmatprep.subr.mxu0 %v396
    %452 = vmatpush1.msra.mxu0 %v395
    %453 = vmatprep.subr.mxu0 %v394
    %454 = vmatpush1.msra.mxu0 %v393
    %455 = vmatprep.subr.mxu0 %v392
    %456 = vmatpush1.msra.mxu0 %v391
    %457 = vmatprep.subr.mxu0 %v390
    %458 = vmatpush1.msra.mxu0 %v389
    %459 = vmatprep.subr.mxu0 %v388
    %460 = vmatpush1.msra.mxu0 %v387
    %461 = vmatprep.subr.mxu0 %v386
    %462 = vmatpush1.msra.mxu0 %v385
    %463 = vmatprep.subr.mxu0 %v384
    %464 = vmatpush1.msra.mxu0 %v383
    %465 = vmatprep.subr.mxu0 0.0
    %466 = vmatpush2.msra.mxu0 0.0
    %467 = vmatprep.subr.mxu0 0.0
    %468 = vmatpush2.msra.mxu0 0.0
    %469 = vmatprep.subr.mxu0 0.0
    %470 = vmatpush2.msra.mxu0 0.0
    %471 = vmatprep.subr.mxu0 0.0
    %472 = vmatpush2.msra.mxu0 0.0
    %473 = vmatprep.subr.mxu0 0.0
    %474 = vmatpush2.msra.mxu0 0.0
    %475 = vmatprep.subr.mxu0 0.0
    %476 = vmatpush2.msra.mxu0 0.0
    %477 = vmatprep.subr.mxu0 0.0
    %478 = vmatpush2.msra.mxu0 0.0
    %479 = vmatprep.subr.mxu0 0.0
    %480 = vmatpush2.msra.mxu0 0.0
    %481 = vmatprep.subr.mxu0 0.0
    %482 = vmatpush2.msra.mxu0 0.0
    %483 = vmatprep.subr.mxu0 0.0
    %484 = vmatpush2.msra.mxu0 0.0
    %485 = vmatprep.subr.mxu0 0.0
    %486 = vmatpush2.msra.mxu0 0.0
    %487 = vmatprep.subr.mxu0 0.0
    %488 = vmatpush2.msra.mxu0 0.0
    %489 = vmatprep.subr.mxu0 0.0
    %490 = vmatpush2.msra.mxu0 0.0
    %491 = vmatprep.subr.mxu0 0.0
    %492 = vmatpush2.msra.mxu0 0.0
    %493 = vmatprep.subr.mxu0 0.0
    %494 = vmatpush2.msra.mxu0 0.0
    %495 = vmatprep.subr.mxu0 0.0
    %496 = vmatpush2.msra.mxu0 0.0
    %497 = vmatprep.mubr.f32.mxu0 0.0
    %498 = vmatmul.mubr.f32.gmra.mxu0 %v382
    %v499 = vpop.f32.mrf.mxu0
    %v500 = vadd.f32 %v428, %v499
    %v501 = vpop.f32.mrf.mxu0
    %v502 = vadd.f32 %v432, %v501
    %503 = vdwg.mxu0
    %v504 = vmax.f32 %v500, 0.0
    %v505 = vmax.f32 %v502, 0.0
    %v506 = vmax.f32 %v504, %v505
    %v507 = vlaneseq
    %v508 = vshrl.u32 %v507, 7
    %v509 = vsub.s32 2, %v508
    %v510 = vrot.slane %v97, %v509
    %v511 = vmul.f32 %v506, %v510
    %512 = vadd.xlane.f32.xlu0 %v511
    %v513 = vpop.xlane.xlu0 %512
    %v514 = vlaneseq
    %v515 = vshrl.u32 %v514, 7
    %v516 = vsub.s32 3, %v515
    %v517 = vrot.slane %v97, %v516
    %v518 = vadd.f32 %v513, %v517
    %vm519 = vcmask 7168
    %520 = vst.msk [vmem:[%s6] sm:$0xff] %vm519, %v518
    // Predicated region
    $region50: #{vftc_forward.1} parent=1 // pred_check
      _
    $region51: #{vftc_forward.1} parent=1 // pred_check_branch
      %522 = sbr.rel (0) target = $region53
    $region52: #{vftc_forward.1} parent=1 // pred_region
      _
    $region53: #{vftc_forward.1} parent=1 // pred_fallthru
      _
    // Predicated region
    $region54: #{vftc_forward.1} parent=1 // pred_check
      _
    $region55: #{vftc_forward.1} parent=1 // pred_check_branch
      %524 = sbr.rel (0) target = $region57
    $region56: #{vftc_forward.1} parent=1 // pred_region
      _
    $region57: #{vftc_forward.1} parent=1 // pred_fallthru
      _
    %525 = vsyncpa [#allocation3], 1
    %526 = vsyncpa [#allocation5], 1
    %527 = vsyncpa [#allocation8], 1
    %528 = vsyncpa [#allocation11], 1

</llo_original>
